<compile_context>
chip_gen: v7x
topology: tpu7x:2x2x1
jax: 0.10.0
libtpu: 0.0.40
codegen_flags: <defaults>
</compile_context>

<pallas_src>
import jax
import jax.numpy as jnp
from jax.experimental import pallas as pl
from jax.experimental.pallas import tpu as pltpu

_BN_EPS = 1e-5  # nn.BatchNorm1d default eps


def lp_block_kernel(x_ref, w_ref, gb_ref, o_ref, acc_ref):
    """Fused Linear + BatchNorm1d (batch stats) + ReLU.

    Block shapes:
      x_ref:   (B, TILE_K)        -- full batch, one input-feature slab
      w_ref:   (TILE_K, TILE_N)   -- weight tile
      gb_ref:  (2, TILE_N)        -- row 0 = gamma, row 1 = beta (f32)
      o_ref:   (B, TILE_N)
      acc_ref: (B, TILE_N) f32 VMEM scratch accumulator
    """
    k = pl.program_id(1)

    @pl.when(k == 0)
    def _init():
        acc_ref[...] = jnp.zeros_like(acc_ref)

    # MXU matmul in native dtype with f32 accumulation (no explicit upcast).
    acc_ref[...] += jnp.dot(
        x_ref[...], w_ref[...], preferred_element_type=jnp.float32)

    @pl.when(k == pl.num_programs(1) - 1)
    def _epilogue():
        z = acc_ref[...]                              # (B, TILE_N) f32
        inv_b = 1.0 / z.shape[0]

        # One-pass batch statistics (per feature, biased variance).
        s = jnp.sum(z, axis=0, keepdims=True)         # (1, TILE_N)
        ss = jnp.sum(z * z, axis=0, keepdims=True)    # (1, TILE_N)
        mean = s * inv_b
        var = ss * inv_b - mean * mean

        gb = gb_ref[...]
        gamma = gb[0:1, :]
        beta = gb[1:2, :]

        # Fold BN into per-feature scale/shift: y = z * scale + shift.
        scale = gamma * jax.lax.rsqrt(var + _BN_EPS)
        shift = beta - mean * scale
        y = z * scale + shift

        o_ref[...] = jnp.maximum(y, 0.0).astype(o_ref.dtype)


def lp_block(x, w, gamma, beta, bias=None, *, tile_n=256, tile_k=512):
    """LpBlock.forward(x) for x of shape (B, input_size), w (input_size, output_size).

    `bias` is accepted for API parity with nn.Linear but intentionally unused:
    a per-feature constant added before train-mode BatchNorm1d is exactly
    cancelled by the mean subtraction (only float rounding differs).
    """
    del bias
    B, IN = x.shape
    IN_w, OUT = w.shape
    assert IN_w == IN, "weight must be (input_size, output_size)"

    # Tile selection: lane-dense output tiles (multiple of 128) and 8-aligned
    # K slabs; fall back to the full dimension when it does not divide evenly
    # (small problems then run as a single grid step — no per-step overhead).
    tile_n = min(tile_n, OUT)
    if OUT % tile_n != 0 or tile_n % 128 != 0:
        tile_n = OUT
    tile_k = min(tile_k, IN)
    if IN % tile_k != 0 or tile_k % 8 != 0:
        tile_k = IN
    grid = (OUT // tile_n, IN // tile_k)

    # Pack gamma/beta into a single (2, OUT) f32 parameter slab (one DMA).
    gb = jnp.concatenate(
        [jnp.asarray(gamma, jnp.float32).reshape(1, OUT),
         jnp.asarray(beta, jnp.float32).reshape(1, OUT)], axis=0)

    x_isz = x.dtype.itemsize
    w_isz = w.dtype.itemsize
    vmem_budget = (
        2 * B * tile_k * x_isz          # x double buffer
        + 2 * tile_k * tile_n * w_isz   # W double buffer
        + 2 * 8 * tile_n * 4            # gamma/beta (sublane-padded)
        + 2 * B * tile_n * x_isz        # output double buffer
        + B * tile_n * 4                # f32 accumulator scratch
        + (4 << 20))                    # headroom
    vmem_limit = max(int(vmem_budget), 32 * 1024 * 1024)

    cost = pl.CostEstimate(
        flops=2 * B * IN * OUT,
        transcendentals=OUT,            # one rsqrt per output feature
        bytes_accessed=(B * IN + B * OUT) * x_isz + IN * OUT * w_isz + 2 * OUT * 4)

    return pl.pallas_call(
        lp_block_kernel,
        out_shape=jax.ShapeDtypeStruct((B, OUT), x.dtype),
        grid=grid,
        in_specs=[
            pl.BlockSpec((B, tile_k), lambda n, k: (0, k)),       # x K-slab
            pl.BlockSpec((tile_k, tile_n), lambda n, k: (k, n)),  # W tile
            pl.BlockSpec((2, tile_n), lambda n, k: (0, n)),       # gamma/beta
        ],
        out_specs=pl.BlockSpec((B, tile_n), lambda n, k: (0, n)),
        scratch_shapes=[pltpu.VMEM((B, tile_n), jnp.float32)],
        compiler_params=pltpu.CompilerParams(
            dimension_semantics=("parallel", "arbitrary"),
            vmem_limit_bytes=vmem_limit),
        cost_estimate=cost,
    )(x, w, gb)


def _reference(x, w, b, gamma, beta):
    """Pure-JAX reference mirroring the PyTorch forward (train-mode BN, with bias)."""
    z = x @ w + b
    mean = jnp.mean(z, axis=0, keepdims=True)
    var = jnp.mean((z - mean) ** 2, axis=0, keepdims=True)
    y = (z - mean) * jax.lax.rsqrt(var + _BN_EPS) * gamma + beta
    return jnp.maximum(y, 0.0)


if __name__ == "__main__":
    B, IN, OUT = 8, 32, 256   # small demo shapes; collapses to a single grid step

    key = jax.random.PRNGKey(0)
    kx, kw, kb = jax.random.split(key, 3)
    x = jax.random.normal(kx, (B, IN), jnp.float32)

    # nn.Linear-style init (uniform in +/- 1/sqrt(fan_in)), deterministic.
    bound = 1.0 / (IN ** 0.5)
    w = jax.random.uniform(kw, (IN, OUT), jnp.float32, -bound, bound)
    b = jax.random.uniform(kb, (1, OUT), jnp.float32, -bound, bound)
    # nn.BatchNorm1d default affine params.
    gamma = jnp.ones((OUT,), jnp.float32)
    beta = jnp.zeros((OUT,), jnp.float32)

    out = lp_block(x, w, gamma, beta, bias=b)
    out = jax.block_until_ready(out)

    ref = _reference(x, w, b, gamma.reshape(1, OUT), beta.reshape(1, OUT))
    assert out.shape == (B, OUT)
    assert bool(jnp.all(jnp.isfinite(out)))
    assert bool(jnp.allclose(out, ref, atol=1e-5, rtol=1e-5)), \
        float(jnp.max(jnp.abs(out - ref)))
    print("KERNEL_OK")
</pallas_src>

<mosaic_0001>
module attributes {stable_mosaic.version = 11 : i64} {
  func.func @lp_block_kernel(%arg0: i32, %arg1: i32, %arg2: memref<8x32xf32, #tpu.memory_space<vmem>>, %arg3: memref<32x256xf32, #tpu.memory_space<vmem>>, %arg4: memref<2x256xf32, #tpu.memory_space<vmem>>, %arg5: memref<8x256xf32, #tpu.memory_space<vmem>>, %arg6: memref<8x256xf32, #tpu.memory_space<vmem>>) attributes {dimension_semantics = [#tpu.dimension_semantics<parallel>, #tpu.dimension_semantics<arbitrary>], iteration_bounds = array<i64: 1, 1>, scalar_prefetch = 0 : i64, scratch_operands = 1 : i64, tpu.core_type = #tpu.core_type<tc>, window_params = [{transform_indices = @transform_0, window_bounds = array<i64: 8, 32>}, {transform_indices = @transform_1, window_bounds = array<i64: 32, 256>}, {transform_indices = @transform_2, window_bounds = array<i64: 2, 256>}, {transform_indices = @transform_3, window_bounds = array<i64: 8, 256>}]} {
    %c0_i32 = arith.constant 0 : i32
    %0 = arith.cmpi eq, %arg1, %c0_i32 : i32
    %1 = arith.extui %0 : i1 to i32
    %c0_i32_0 = arith.constant 0 : i32
    %2 = arith.cmpi ne, %1, %c0_i32_0 : i32
    scf.if %2 {
      %cst_10 = arith.constant 0.000000e+00 : f32
      %12 = vector.broadcast %cst_10 : f32 to vector<8x256xf32>
      %c0_11 = arith.constant 0 : index
      %c0_12 = arith.constant 0 : index
      %13 = vector.load %arg6[%c0_11, %c0_12] : memref<8x256xf32, #tpu.memory_space<vmem>>, vector<8x256xf32>
      tpu.vector_store %arg6[%c0_11, %c0_12], %12 {strides = array<i32>} : memref<8x256xf32, #tpu.memory_space<vmem>>, vector<8x256xf32>,
    } else {
    }
    %c0 = arith.constant 0 : index
    %c0_1 = arith.constant 0 : index
    %3 = vector.load %arg6[%c0, %c0_1] : memref<8x256xf32, #tpu.memory_space<vmem>>, vector<8x256xf32>
    %c0_2 = arith.constant 0 : index
    %c0_3 = arith.constant 0 : index
    %4 = vector.load %arg2[%c0_2, %c0_3] : memref<8x32xf32, #tpu.memory_space<vmem>>, vector<8x32xf32>
    %c0_4 = arith.constant 0 : index
    %c0_5 = arith.constant 0 : index
    %5 = vector.load %arg3[%c0_4, %c0_5] : memref<32x256xf32, #tpu.memory_space<vmem>>, vector<32x256xf32>
    %cst = arith.constant dense<0.000000e+00> : vector<8x256xf32>
    %6 = tpu.matmul %4, %5, %cst {dimension_numbers = #tpu.dot_dimension_numbers<[1], [0], [0], [1], [0, 0, 1, 1], [], []>} : vector<8x32xf32>, vector<32x256xf32>, vector<8x256xf32> -> vector<8x256xf32>
    %7 = arith.addf %3, %6 : vector<8x256xf32>
    %c0_6 = arith.constant 0 : index
    %c0_7 = arith.constant 0 : index
    %8 = vector.load %arg6[%c0_6, %c0_7] : memref<8x256xf32, #tpu.memory_space<vmem>>, vector<8x256xf32>
    tpu.vector_store %arg6[%c0_6, %c0_7], %7 {strides = array<i32>} : memref<8x256xf32, #tpu.memory_space<vmem>>, vector<8x256xf32>,
    %c0_i32_8 = arith.constant 0 : i32
    %9 = arith.cmpi eq, %arg1, %c0_i32_8 : i32
    %10 = arith.extui %9 : i1 to i32
    %c0_i32_9 = arith.constant 0 : i32
    %11 = arith.cmpi ne, %10, %c0_i32_9 : i32
    scf.if %11 {
      %c0_10 = arith.constant 0 : index
      %c0_11 = arith.constant 0 : index
      %12 = vector.load %arg6[%c0_10, %c0_11] : memref<8x256xf32, #tpu.memory_space<vmem>>, vector<8x256xf32>
      %cst_12 = arith.constant dense<0.000000e+00> : vector<256xf32>
      %13 = vector.multi_reduction <add>, %12, %cst_12 [0] : vector<8x256xf32> to vector<256xf32>
      %14 = vector.shape_cast %13 : vector<256xf32> to vector<1x256xf32>
      %15 = arith.mulf %12, %12 : vector<8x256xf32>
      %cst_13 = arith.constant dense<0.000000e+00> : vector<256xf32>
      %16 = vector.multi_reduction <add>, %15, %cst_13 [0] : vector<8x256xf32> to vector<256xf32>
      %17 = vector.shape_cast %16 : vector<256xf32> to vector<1x256xf32>
      %cst_14 = arith.constant 1.250000e-01 : f32
      %18 = vector.broadcast %cst_14 : f32 to vector<1x256xf32>
      %19 = arith.mulf %14, %18 : vector<1x256xf32>
      %cst_15 = arith.constant 1.250000e-01 : f32
      %20 = vector.broadcast %cst_15 : f32 to vector<1x256xf32>
      %21 = arith.mulf %17, %20 : vector<1x256xf32>
      %22 = arith.mulf %19, %19 : vector<1x256xf32>
      %23 = arith.subf %21, %22 : vector<1x256xf32>
      %c0_16 = arith.constant 0 : index
      %c0_17 = arith.constant 0 : index
      %24 = vector.load %arg4[%c0_16, %c0_17] : memref<2x256xf32, #tpu.memory_space<vmem>>, vector<2x256xf32>
      %25 = vector.extract_strided_slice %24 {offsets = [0, 0], sizes = [1, 256], strides = [1, 1]} : vector<2x256xf32> to vector<1x256xf32>
      %26 = vector.extract_strided_slice %24 {offsets = [1, 0], sizes = [1, 256], strides = [1, 1]} : vector<2x256xf32> to vector<1x256xf32>
      %cst_18 = arith.constant 9.99999974E-6 : f32
      %27 = vector.broadcast %cst_18 : f32 to vector<1x256xf32>
      %28 = arith.addf %23, %27 : vector<1x256xf32>
      %29 = math.rsqrt %28 : vector<1x256xf32>
      %30 = arith.mulf %25, %29 : vector<1x256xf32>
      %31 = arith.mulf %19, %30 : vector<1x256xf32>
      %32 = arith.subf %26, %31 : vector<1x256xf32>
      %33 = vector.broadcast %30 : vector<1x256xf32> to vector<8x256xf32>
      %34 = arith.mulf %12, %33 : vector<8x256xf32>
      %35 = vector.broadcast %32 : vector<1x256xf32> to vector<8x256xf32>
      %36 = arith.addf %34, %35 : vector<8x256xf32>
      %cst_19 = arith.constant 0.000000e+00 : f32
      %37 = vector.broadcast %cst_19 : f32 to vector<8x256xf32>
      %38 = arith.maximumf %36, %37 : vector<8x256xf32>
      %c0_20 = arith.constant 0 : index
      %c0_21 = arith.constant 0 : index
      %39 = vector.load %arg5[%c0_20, %c0_21] : memref<8x256xf32, #tpu.memory_space<vmem>>, vector<8x256xf32>
      tpu.vector_store %arg5[%c0_20, %c0_21], %38 {strides = array<i32>} : memref<8x256xf32, #tpu.memory_space<vmem>>, vector<8x256xf32>,
    } else {
    }
    return
  }
  func.func @transform_0(%arg0: i32, %arg1: i32) -> (i32, i32) {
    %c0_i32 = arith.constant 0 : i32
    %c0_i32_0 = arith.constant 0 : i32
    return %c0_i32, %arg1 : i32, i32
  }
  func.func @transform_1(%arg0: i32, %arg1: i32) -> (i32, i32) {
    %c0_i32 = arith.constant 0 : i32
    return %arg1, %arg0 : i32, i32
  }
  func.func @transform_2(%arg0: i32, %arg1: i32) -> (i32, i32) {
    %c0_i32 = arith.constant 0 : i32
    %c0_i32_0 = arith.constant 0 : i32
    return %c0_i32, %arg0 : i32, i32
  }
  func.func @transform_3(%arg0: i32, %arg1: i32) -> (i32, i32) {
    %c0_i32 = arith.constant 0 : i32
    %c0_i32_0 = arith.constant 0 : i32
    return %c0_i32, %arg0 : i32, i32
  }
}

</mosaic_0001>

<llo_original>
// kernel: tpu_custom_call.1
$region0: #{tpu_custom_call.1}
  #allocation0 [shape = 'u32[]', space=smem, size = 0x4, offset = 0x4, fixed_abs, tag = 'smem constant byte address 0x4 - core index']
  #allocation1 [shape = 'u32[144,128]{1,0:T(1,128)}', space=vmem, size = 0x12000, scoped, tag = 'internal scratch']
  #allocation2 [shape = 'f32[8,256]{1,0:T(8,128)}', space=vmem, size = 0x2000, scoped, tag = 'scratch operand']
  %s0 = inlined_call_operand.hbm [shape: f32[8,32], index: 0, kind: input, shape index: {}]
  %s1 = inlined_call_operand.hbm [shape: f32[32,256], index: 1, kind: input, shape index: {}]
  %s2 = inlined_call_operand.vmem [shape: f32[2,256], index: 2, kind: input, shape index: {}]
  %s3 = inlined_call_operand.hbm [shape: f32[8,256], index: 3, kind: output, shape index: {}]
  %s4 = sld [smem:[#allocation0]]
  $region38: #{tpu_custom_call.1} parent=0
    _
  %s6 = ssub.s32 1, %s4
  %s7 = scalar_select 0, %s6, %s4
  $region1: #{tpu_custom_call.1} parent=0
    #allocation3 [shape = 'u8[4096]{0}', space=vmem, size = 0x1000, scoped, tag = 'input window, operand 0, single buffered']
    #allocation4 [shape = 's32[1]{0}', space=sflag, size = 0x4, scoped, tag = 'scoped memory for tpu_custom_call.1']
    #allocation5 [shape = 's32[1]{0}', space=sflag, size = 0x4, scoped, tag = 'scoped memory for tpu_custom_call.1']
    #allocation6 [shape = 'u8[32768]{0}', space=vmem, size = 0x8000, scoped, tag = 'input window, operand 1, single buffered']
    #allocation7 [shape = 's32[1]{0}', space=sflag, size = 0x4, scoped, tag = 'scoped memory for tpu_custom_call.1']
    #allocation8 [shape = 'u8[8192]{0}', space=vmem, size = 0x2000, scoped, tag = 'output window, operand 0, single buffered']
    %8 = vsyncpa [#allocation4], 0
    %9 = vsyncpa [#allocation7], 0
    %10 = vsyncpa [#allocation5], 0
    // Predicated region
    $region2: #{tpu_custom_call.1} parent=1 // pred_check
      _
    $region3: #{tpu_custom_call.1} parent=1 // pred_check_branch
      %12 = sbr.rel (0) target = $region5
    $region4: #{tpu_custom_call.1} parent=1 // pred_region
      %s14 = ssub.s32 128, 128
      %15 = vsyncadd [#allocation4], %s14
      %s17 = sshll.u32 [#allocation3], 4
      %s18 = int_to_ptr.vmem [resolvable:$true] %s17
      %20 = dma.hbm_to_vmem [thread:$0]  %s0, 128, %s18, [#allocation4]
    $region5: #{tpu_custom_call.1} parent=1 // pred_fallthru
      _
    // Predicated region
    $region6: #{tpu_custom_call.1} parent=1 // pred_check
      _
    $region7: #{tpu_custom_call.1} parent=1 // pred_check_branch
      %22 = sbr.rel (0) target = $region9
    $region8: #{tpu_custom_call.1} parent=1 // pred_region
      %s24 = ssub.s32 1024, 1024
      %25 = vsyncadd [#allocation7], %s24
      %s26 = sshll.u32 [#allocation6], 4
      %s27 = int_to_ptr.vmem [resolvable:$true] %s26
      %32 = dma.hbm_to_vmem [thread:$0]  %s1, 1024, %s27, [#allocation7], 256, 256, 16
    $region9: #{tpu_custom_call.1} parent=1 // pred_fallthru
      _
    // Predicated region
    $region10: #{tpu_custom_call.1} parent=1 // pred_check
      _
    $region11: #{tpu_custom_call.1} parent=1 // pred_check_branch
      %34 = sbr.rel (0) target = $region13
    $region12: #{tpu_custom_call.1} parent=1 // pred_region
      _
    $region13: #{tpu_custom_call.1} parent=1 // pred_fallthru
      _
    // Predicated region
    $region14: #{tpu_custom_call.1} parent=1 // pred_check
      _
    $region15: #{tpu_custom_call.1} parent=1 // pred_check_branch
      %36 = sbr.rel (0) target = $region17
    $region16: #{tpu_custom_call.1} parent=1 // pred_region
      %37 = dma.done [#allocation4], 128
    $region17: #{tpu_custom_call.1} parent=1 // pred_fallthru
      _
    // Predicated region
    $region18: #{tpu_custom_call.1} parent=1 // pred_check
      _
    $region19: #{tpu_custom_call.1} parent=1 // pred_check_branch
      %39 = sbr.rel (0) target = $region21
    $region20: #{tpu_custom_call.1} parent=1 // pred_region
      %40 = dma.done [#allocation7], 1024
    $region21: #{tpu_custom_call.1} parent=1 // pred_fallthru
      _
    %p41 = scmp.eq.s32.totalorder 0, 0
    // Predicated region
    $region22: #{tpu_custom_call.1} parent=1 // pred_check
      %p42 = pneg %p41
    $region23: #{tpu_custom_call.1} parent=1 // pred_check_branch
      %44 = sbr.rel (%p42) target = $region25
    $region24: #{tpu_custom_call.1} parent=1 // pred_region
      %45 = vst [vmem:[#allocation2] sm:$0xff] 0.0
      %46 = vst [vmem:[#allocation2 + $0x8] sm:$0xff] 0.0
    $region25: #{tpu_custom_call.1} parent=1 // pred_fallthru
      _
    %v47 = vld [vmem:[#allocation2] sm:$0xff]
    %v48 = vld [vmem:[#allocation2 + $0x8] sm:$0xff]
    %v49 = vld [vmem:[#allocation3] sm:$0xff]
    %v50 = vld [vmem:[#allocation6] sm:$0xff]
    %v51 = vld [vmem:[#allocation6 + $0x8] sm:$0xff]
    %v52 = vld [vmem:[#allocation6 + $0x10] sm:$0xff]
    %v53 = vld [vmem:[#allocation6 + $0x18] sm:$0xff]
    %v54 = vld [vmem:[#allocation6 + $0x20] sm:$0xff]
    %v55 = vld [vmem:[#allocation6 + $0x28] sm:$0xff]
    %v56 = vld [vmem:[#allocation6 + $0x30] sm:$0xff]
    %v57 = vld [vmem:[#allocation6 + $0x38] sm:$0xff]
    %vm58 = vcmask 261120
    %v60 = vsel %vm58, %v49, 0
    %62 = vmatprep.subr.mxu0 %v51
    %63 = vmatpush1.msra.mxu0 %v50
    %64 = vmatprep.subr.mxu0 %v53
    %65 = vmatpush1.msra.mxu0 %v52
    %66 = vmatprep.subr.mxu0 %v55
    %67 = vmatpush1.msra.mxu0 %v54
    %68 = vmatprep.subr.mxu0 %v57
    %69 = vmatpush1.msra.mxu0 %v56
    %70 = vmatprep.subr.mxu0 0.0
    %71 = vmatpush1.msra.mxu0 0.0
    %72 = vmatprep.subr.mxu0 0.0
    %73 = vmatpush1.msra.mxu0 0.0
    %74 = vmatprep.subr.mxu0 0.0
    %75 = vmatpush1.msra.mxu0 0.0
    %76 = vmatprep.subr.mxu0 0.0
    %77 = vmatpush1.msra.mxu0 0.0
    %78 = vmatprep.subr.mxu0 0.0
    %79 = vmatpush1.msra.mxu0 0.0
    %80 = vmatprep.subr.mxu0 0.0
    %81 = vmatpush1.msra.mxu0 0.0
    %82 = vmatprep.subr.mxu0 0.0
    %83 = vmatpush1.msra.mxu0 0.0
    %84 = vmatprep.subr.mxu0 0.0
    %85 = vmatpush1.msra.mxu0 0.0
    %86 = vmatprep.subr.mxu0 0.0
    %87 = vmatpush1.msra.mxu0 0.0
    %88 = vmatprep.subr.mxu0 0.0
    %89 = vmatpush1.msra.mxu0 0.0
    %90 = vmatprep.subr.mxu0 0.0
    %91 = vmatpush1.msra.mxu0 0.0
    %92 = vmatprep.subr.mxu0 0.0
    %93 = vmatpush1.msra.mxu0 0.0
    %94 = vmatprep.subr.mxu0 0.0
    %95 = vmatpush1.msra.mxu0 0.0
    %96 = vmatprep.subr.mxu0 0.0
    %97 = vmatpush1.msra.mxu0 0.0
    %98 = vmatprep.subr.mxu0 0.0
    %99 = vmatpush1.msra.mxu0 0.0
    %100 = vmatprep.subr.mxu0 0.0
    %101 = vmatpush1.msra.mxu0 0.0
    %102 = vmatprep.subr.mxu0 0.0
    %103 = vmatpush1.msra.mxu0 0.0
    %104 = vmatprep.subr.mxu0 0.0
    %105 = vmatpush1.msra.mxu0 0.0
    %106 = vmatprep.subr.mxu0 0.0
    %107 = vmatpush1.msra.mxu0 0.0
    %108 = vmatprep.subr.mxu0 0.0
    %109 = vmatpush1.msra.mxu0 0.0
    %110 = vmatprep.subr.mxu0 0.0
    %111 = vmatpush1.msra.mxu0 0.0
    %112 = vmatprep.subr.mxu0 0.0
    %113 = vmatpush1.msra.mxu0 0.0
    %114 = vmatprep.subr.mxu0 0.0
    %115 = vmatpush1.msra.mxu0 0.0
    %116 = vmatprep.subr.mxu0 0.0
    %117 = vmatpush1.msra.mxu0 0.0
    %118 = vmatprep.subr.mxu0 0.0
    %119 = vmatpush1.msra.mxu0 0.0
    %120 = vmatprep.subr.mxu0 0.0
    %121 = vmatpush1.msra.mxu0 0.0
    %122 = vmatprep.subr.mxu0 0.0
    %123 = vmatpush1.msra.mxu0 0.0
    %124 = vmatprep.subr.mxu0 0.0
    %125 = vmatpush1.msra.mxu0 0.0
    %126 = vmatprep.mubr.f32.mxu0 0.0
    %127 = vmatmul.mubr.f32.gmra.mrb[0].mxu0 %v60
    %v128 = vpop.f32.mrb[0].mxu0
    %v129 = vadd.f32 0.0, %v128
    %v130 = vpop.f32.mrb[0].mxu0
    %v131 = vadd.f32 0.0, %v130
    %132 = vdwg.mxu0
    %v133 = vadd.f32 %v47, %v129
    %v134 = vadd.f32 %v48, %v131
    %135 = vst [vmem:[#allocation2] sm:$0xff] %v133
    %136 = vst [vmem:[#allocation2 + $0x8] sm:$0xff] %v134
    // Predicated region
    $region26: #{tpu_custom_call.1} parent=1 // pred_check
      %p137 = pneg %p41
    $region27: #{tpu_custom_call.1} parent=1 // pred_check_branch
      %139 = sbr.rel (%p137) target = $region29
    $region28: #{tpu_custom_call.1} parent=1 // pred_region
      %v140 = vld [vmem:[#allocation2] sm:$0xff]
      %v141 = vld [vmem:[#allocation2 + $0x8] sm:$0xff]
      %v142 = vrot.slane %v140, 4
      %v143 = vadd.f32 %v140, %v142
      %v144 = vrot.slane %v143, 2
      %v145 = vadd.f32 %v143, %v144
      %v146 = vrot.slane %v145, 1
      %v147 = vadd.f32 %v145, %v146
      %v148 = vrot.slane %v141, 4
      %v149 = vadd.f32 %v141, %v148
      %v150 = vrot.slane %v149, 2
      %v151 = vadd.f32 %v149, %v150
      %v152 = vrot.slane %v151, 1
      %v153 = vadd.f32 %v151, %v152
      %v154 = vmul.f32 %v140, %v140
      %v155 = vmul.f32 %v141, %v141
      %v156 = vrot.slane %v154, 4
      %v157 = vadd.f32 %v154, %v156
      %v158 = vrot.slane %v157, 2
      %v159 = vadd.f32 %v157, %v158
      %v160 = vrot.slane %v159, 1
      %v161 = vadd.f32 %v159, %v160
      %v162 = vrot.slane %v155, 4
      %v163 = vadd.f32 %v155, %v162
      %v164 = vrot.slane %v163, 2
      %v165 = vadd.f32 %v163, %v164
      %v166 = vrot.slane %v165, 1
      %v167 = vadd.f32 %v165, %v166
      %v168 = vmul.f32 %v147, 0.125
      %v169 = vmul.f32 %v153, 0.125
      %v170 = vmul.f32 %v161, 0.125
      %v171 = vmul.f32 %v167, 0.125
      %v172 = vmul.f32 %v168, %v168
      %v173 = vmul.f32 %v169, %v169
      %v174 = vsub.f32 %v170, %v172
      %v175 = vsub.f32 %v171, %v173
      %v176 = vld [vmem:[%s2] sm:$0xf]
      %v177 = vadd.f32 %v174, 1e-05
      %v178 = vadd.f32 %v175, 1e-05
      %v179 = vrsqrt.pop %v177
      %v180 = vrsqrt.pop %v178
      %v183 = vcombine.low %v179, %v180
      %v185 = vunpack.c.l.s4 1983009808
      %v186 = vunpack.c.0.s8 %v185
      %v187 = vlaneseq
      %v188 = vshrl.u32 %v187, 7
      %v189 = vsub.s32 %v186, %v188
      %v190 = vrot.slane %v183, %v189
      %v192 = vmul.f32 %v176, %v190
      %v194 = vlaneseq
      %v195 = vshrl.u32 %v194, 7
      %v196 = vsub.s32 0, %v195
      %v197 = vrot.slane %v192, %v196
      %v198 = vlaneseq
      %v199 = vshrl.u32 %v198, 7
      %v200 = vsub.s32 2, %v199
      %v201 = vrot.slane %v192, %v200
      %v204 = vmul.f32 %v168, %v197
      %v205 = vmul.f32 %v169, %v201
      %v208 = vcombine.low %v204, %v205
      %v210 = vunpack.c.l.s4 1983009808
      %v211 = vunpack.c.0.s8 %v210
      %v212 = vlaneseq
      %v213 = vshrl.u32 %v212, 7
      %v214 = vsub.s32 %v211, %v213
      %v215 = vrot.slane %v208, %v214
      %v216 = vrot.slane %v215, 7
      %v218 = vsub.f32 %v176, %v216
      %v219 = vlaneseq
      %v220 = vshrl.u32 %v219, 7
      %v221 = vsub.s32 0, %v220
      %v222 = vrot.slane %v197, %v221
      %v223 = vlaneseq
      %v224 = vshrl.u32 %v223, 7
      %v225 = vsub.s32 0, %v224
      %v226 = vrot.slane %v201, %v225
      %v227 = vmul.f32 %v140, %v222
      %v228 = vmul.f32 %v141, %v226
      %v230 = vlaneseq
      %v231 = vshrl.u32 %v230, 7
      %v232 = vsub.s32 1, %v231
      %v233 = vrot.slane %v218, %v232
      %v234 = vlaneseq
      %v235 = vshrl.u32 %v234, 7
      %v236 = vsub.s32 3, %v235
      %v237 = vrot.slane %v218, %v236
      %v240 = vlaneseq
      %v241 = vshrl.u32 %v240, 7
      %v242 = vsub.s32 1, %v241
      %v243 = vrot.slane %v233, %v242
      %v244 = vlaneseq
      %v245 = vshrl.u32 %v244, 7
      %v246 = vsub.s32 1, %v245
      %v247 = vrot.slane %v237, %v246
      %v248 = vadd.f32 %v227, %v243
      %v249 = vadd.f32 %v228, %v247
      %v250 = vmax.f32 %v248, 0.0
      %v251 = vmax.f32 %v249, 0.0
      %252 = vst [vmem:[#allocation8] sm:$0xff] %v250
      %253 = vst [vmem:[#allocation8 + $0x8] sm:$0xff] %v251
    $region29: #{tpu_custom_call.1} parent=1 // pred_fallthru
      _
    // Predicated region
    $region30: #{tpu_custom_call.1} parent=1 // pred_check
      _
    $region31: #{tpu_custom_call.1} parent=1 // pred_check_branch
      %255 = sbr.rel (0) target = $region33
    $region32: #{tpu_custom_call.1} parent=1 // pred_region
      %s257 = ssub.s32 256, 256
      %258 = vsyncadd [#allocation5], %s257
      %s260 = sshll.u32 [#allocation8], 4
      %s261 = int_to_ptr.vmem [resolvable:$true] %s260
      %263 = dma.vmem_to_hbm [thread:$0]  %s261, 256, %s3, [#allocation5]
    $region33: #{tpu_custom_call.1} parent=1 // pred_fallthru
      _
    // Predicated region
    $region34: #{tpu_custom_call.1} parent=1 // pred_check
      _
    $region35: #{tpu_custom_call.1} parent=1 // pred_check_branch
      %265 = sbr.rel (0) target = $region37
    $region36: #{tpu_custom_call.1} parent=1 // pred_region
      %266 = dma.done [#allocation5], 256
    $region37: #{tpu_custom_call.1} parent=1 // pred_fallthru
      _
    %267 = vsyncpa [#allocation4], 1
    %268 = vsyncpa [#allocation7], 1
    %269 = vsyncpa [#allocation5], 1

</llo_original>
